<compile_context>
chip_gen: v6e
topology: v6e:2x2x1
jax: 0.10.0
libtpu: 0.0.40
codegen_flags: <defaults>
</compile_context>

<pallas_src>
import jax
import jax.numpy as jnp
from jax.experimental import pallas as pl
from jax.experimental.pallas import tpu as pltpu


def _round_up(n, m):
    return ((n + m - 1) // m) * m


def _cdiv(a, b):
    return -(-a // b)


def critic2_kernel(x_ref, w1_ref, b1_ref, w2_ref, b2_ref,
                   w3_ref, b3_ref, w4_ref, b4_ref, o_ref):
    """Fused forward for one batch tile: relu(fc1)->relu(fc2)->relu(fc3)->fc4."""
    bf16 = jnp.bfloat16
    x = x_ref[...].astype(bf16)            # no-op when x is already bf16

    h = jnp.dot(x, w1_ref[...], preferred_element_type=jnp.float32) + b1_ref[...]
    h = jnp.maximum(h, 0.0).astype(bf16)   # ReLU in f32, keep activations bf16

    h = jnp.dot(h, w2_ref[...], preferred_element_type=jnp.float32) + b2_ref[...]
    h = jnp.maximum(h, 0.0).astype(bf16)

    h = jnp.dot(h, w3_ref[...], preferred_element_type=jnp.float32) + b3_ref[...]
    h = jnp.maximum(h, 0.0).astype(bf16)

    # fc4 (out_features == 1): (1, 64) . (BT, 64)^T -> (1, BT)  (Q.K^T-style
    # dot_general), so the per-step output slab is lane-dense instead of a
    # (BT, 1) column of masked stores.
    out_row = jax.lax.dot_general(
        w4_ref[...], h, (((1,), (1,)), ((), ())),
        preferred_element_type=jnp.float32) + b4_ref[...]
    o_ref[...] = out_row.astype(o_ref.dtype)


def critic2_forward(x, params, block_batch=2048):
    """x: (B, num_input) float32 or bfloat16 -> (B, 1) float32."""
    B, num_input = x.shape
    w1, b1, w2, b2, w3, b3, w4, b4 = params

    # Tile rows: multiple of 16 (bf16-safe sublane packing), capped at
    # block_batch, and capped at ceil(B/2) so there are >= 2 grid steps
    # (keeps both v7x TensorCores busy via the "parallel" axis).
    bt = _round_up(max(1, min(block_batch, B)), 16)
    if B > 16:
        bt = min(bt, _round_up(_cdiv(B, 2), 16))
    num_tiles = _cdiv(B, bt)

    def const(a):
        # Full-array block + constant index map -> loaded once, VMEM-resident.
        nd = a.ndim
        return pl.BlockSpec(a.shape, lambda i: (0,) * nd)

    flops = 2 * B * (num_input * 128 + 128 * 256 + 256 * 64 + 64 * 1)
    bytes_accessed = (B * num_input * x.dtype.itemsize + B * 4 +
                      sum(int(p.size) * p.dtype.itemsize for p in params))

    out = pl.pallas_call(
        critic2_kernel,
        out_shape=jax.ShapeDtypeStruct((num_tiles, 1, bt), jnp.float32),
        grid=(num_tiles,),
        in_specs=[pl.BlockSpec((bt, num_input), lambda i: (i, 0)),
                  const(w1), const(b1), const(w2), const(b2),
                  const(w3), const(b3), const(w4), const(b4)],
        out_specs=pl.BlockSpec((None, 1, bt), lambda i: (i, 0, 0)),
        compiler_params=pltpu.CompilerParams(
            dimension_semantics=("parallel",)),
        cost_estimate=pl.CostEstimate(flops=flops, transcendentals=0,
                                      bytes_accessed=bytes_accessed),
    )(x, w1, b1, w2, b2, w3, b3, w4, b4)

    # (num_tiles, 1, bt) row-major is batch order; trim the ragged tail (only
    # the last block may have read past B; those rows are junk and dropped).
    return out.reshape(num_tiles * bt, 1)[:B]


def init_params(key, num_input):
    """Deterministic init mimicking nn.Linear's U(-1/sqrt(fan_in), +1/sqrt(fan_in)).

    Weights stored as (in, out) bf16 (MXU-fed); fc4 weight stored as a (1, 64)
    bf16 row (lhs of the Q.K^T-style head dot).  Biases: (1, out) f32.
    """
    dims = [(num_input, 128), (128, 256), (256, 64), (64, 1)]
    params = []
    for fan_in, fan_out in dims:
        key, kw, kb = jax.random.split(key, 3)
        bound = 1.0 / (fan_in ** 0.5)
        w = jax.random.uniform(kw, (fan_in, fan_out), jnp.float32, -bound, bound)
        b = jax.random.uniform(kb, (1, fan_out), jnp.float32, -bound, bound)
        if fan_out == 1:
            w = w.T                       # fc4: (1, 64) row
        params += [w.astype(jnp.bfloat16), b]
    return tuple(params)


def reference_forward_f32(x, params):
    """Plain-JAX f32 reference of the same forward (dropout = identity)."""
    w1, b1, w2, b2, w3, b3, w4, b4 = params
    f32 = jnp.float32
    h = jnp.maximum(x.astype(f32) @ w1.astype(f32) + b1, 0.0)
    h = jnp.maximum(h @ w2.astype(f32) + b2, 0.0)
    h = jnp.maximum(h @ w3.astype(f32) + b3, 0.0)
    return h @ w4.astype(f32).T + b4


def reference_forward_mixed(x, params):
    """Reference mirroring the kernel's bf16-MXU / f32-accumulate arithmetic."""
    w1, b1, w2, b2, w3, b3, w4, b4 = params
    bf16 = jnp.bfloat16
    h = jnp.maximum(
        jnp.dot(x.astype(bf16), w1, preferred_element_type=jnp.float32) + b1, 0.0)
    h = jnp.maximum(
        jnp.dot(h.astype(bf16), w2, preferred_element_type=jnp.float32) + b2, 0.0)
    h = jnp.maximum(
        jnp.dot(h.astype(bf16), w3, preferred_element_type=jnp.float32) + b3, 0.0)
    return jnp.dot(h.astype(bf16), w4.T, preferred_element_type=jnp.float32) + b4


if __name__ == "__main__":
    key = jax.random.PRNGKey(0)
    key, kx = jax.random.split(key)

    batch = 64
    num_input = 32  # Critic2(num_input=32)

    x = jax.random.normal(kx, (batch, num_input), dtype=jnp.float32)
    params = init_params(key, num_input)

    ref_mixed = reference_forward_mixed(x, params)
    ref_f32 = reference_forward_f32(x, params)

    # Default path: >= 2 grid steps (v7x megacore), lane-dense output slabs.
    out = jax.block_until_ready(critic2_forward(x, params))
    assert out.shape == (batch, 1), out.shape
    assert jnp.allclose(out, ref_mixed, atol=1e-3, rtol=1e-3), (
        f"max abs diff vs mixed ref {jnp.max(jnp.abs(out - ref_mixed))}")
    assert jnp.allclose(out, ref_f32, atol=5e-2, rtol=5e-2), (
        f"max abs diff vs f32 ref {jnp.max(jnp.abs(out - ref_f32))}")

    # Small-tile path (exercises >2 grid steps with VMEM-resident weights).
    out_small = jax.block_until_ready(critic2_forward(x, params, block_batch=16))
    assert out_small.shape == (batch, 1), out_small.shape
    assert jnp.allclose(out_small, ref_mixed, atol=1e-3, rtol=1e-3), (
        f"max abs diff (small tiles) {jnp.max(jnp.abs(out_small - ref_mixed))}")

    # Ragged-batch path: B not a multiple of the tile -> last block is clipped
    # by Pallas; wrapper trims the junk rows (no jnp.pad HBM copy anywhere).
    b_ragged = 52
    out_ragged = jax.block_until_ready(critic2_forward(x[:b_ragged], params))
    assert out_ragged.shape == (b_ragged, 1), out_ragged.shape
    assert jnp.allclose(out_ragged, ref_mixed[:b_ragged], atol=1e-3, rtol=1e-3), (
        f"max abs diff (ragged) {jnp.max(jnp.abs(out_ragged - ref_mixed[:b_ragged]))}")

    # bf16-input path: halves the dominant HBM read stream; the kernel's bf16
    # cast becomes a no-op, so the result matches the f32-input run.
    out_bf16 = jax.block_until_ready(
        critic2_forward(x.astype(jnp.bfloat16), params))
    assert jnp.allclose(out_bf16, out, atol=1e-6, rtol=1e-6), (
        f"bf16-input mismatch {jnp.max(jnp.abs(out_bf16 - out))}")

    print("KERNEL_OK")
</pallas_src>

<mosaic_0001>
module attributes {stable_mosaic.version = 11 : i64} {
  func.func @critic2_kernel(%arg0: i32, %arg1: memref<32x32xf32, #tpu.memory_space<vmem>>, %arg2: memref<32x128xbf16, #tpu.memory_space<vmem>>, %arg3: memref<1x128xf32, #tpu.memory_space<vmem>>, %arg4: memref<128x256xbf16, #tpu.memory_space<vmem>>, %arg5: memref<1x256xf32, #tpu.memory_space<vmem>>, %arg6: memref<256x64xbf16, #tpu.memory_space<vmem>>, %arg7: memref<1x64xf32, #tpu.memory_space<vmem>>, %arg8: memref<1x64xbf16, #tpu.memory_space<vmem>>, %arg9: memref<1x1xf32, #tpu.memory_space<vmem>>, %arg10: memref<1x1x32xf32, #tpu.memory_space<vmem>>) attributes {dimension_semantics = [#tpu.dimension_semantics<parallel>], iteration_bounds = array<i64: 2>, scalar_prefetch = 0 : i64, scratch_operands = 0 : i64, tpu.core_type = #tpu.core_type<tc>, window_params = [{transform_indices = @transform_0, window_bounds = array<i64: 32, 32>}, {pipeline_mode = #tpu.pipeline_mode<synchronous>, transform_indices = @transform_1, window_bounds = array<i64: 32, 128>}, {pipeline_mode = #tpu.pipeline_mode<synchronous>, transform_indices = @transform_2, window_bounds = array<i64: 1, 128>}, {pipeline_mode = #tpu.pipeline_mode<synchronous>, transform_indices = @transform_3, window_bounds = array<i64: 128, 256>}, {pipeline_mode = #tpu.pipeline_mode<synchronous>, transform_indices = @transform_4, window_bounds = array<i64: 1, 256>}, {pipeline_mode = #tpu.pipeline_mode<synchronous>, transform_indices = @transform_5, window_bounds = array<i64: 256, 64>}, {pipeline_mode = #tpu.pipeline_mode<synchronous>, transform_indices = @transform_6, window_bounds = array<i64: 1, 64>}, {pipeline_mode = #tpu.pipeline_mode<synchronous>, transform_indices = @transform_7, window_bounds = array<i64: 1, 64>}, {pipeline_mode = #tpu.pipeline_mode<synchronous>, transform_indices = @transform_8, window_bounds = array<i64: 1, 1>}, {transform_indices = @transform_9, window_bounds = array<i64: 1, 1, 32>}]} {
    %c0 = arith.constant 0 : index
    %c0_0 = arith.constant 0 : index
    %0 = vector.load %arg1[%c0, %c0_0] : memref<32x32xf32, #tpu.memory_space<vmem>>, vector<32x32xf32>
    %1 = arith.truncf %0 : vector<32x32xf32> to vector<32x32xbf16>
    %c0_1 = arith.constant 0 : index
    %c0_2 = arith.constant 0 : index
    %2 = vector.load %arg2[%c0_1, %c0_2] : memref<32x128xbf16, #tpu.memory_space<vmem>>, vector<32x128xbf16>
    %cst = arith.constant dense<0.000000e+00> : vector<32x128xf32>
    %3 = tpu.matmul %1, %2, %cst {dimension_numbers = #tpu.dot_dimension_numbers<[1], [0], [0], [1], [0, 0, 1, 1], [], []>} : vector<32x32xbf16>, vector<32x128xbf16>, vector<32x128xf32> -> vector<32x128xf32>
    %c0_3 = arith.constant 0 : index
    %c0_4 = arith.constant 0 : index
    %4 = vector.load %arg3[%c0_3, %c0_4] : memref<1x128xf32, #tpu.memory_space<vmem>>, vector<1x128xf32>
    %5 = vector.broadcast %4 : vector<1x128xf32> to vector<32x128xf32>
    %6 = arith.addf %3, %5 : vector<32x128xf32>
    %cst_5 = arith.constant 0.000000e+00 : f32
    %7 = vector.broadcast %cst_5 : f32 to vector<32x128xf32>
    %8 = arith.maximumf %6, %7 : vector<32x128xf32>
    %9 = arith.truncf %8 : vector<32x128xf32> to vector<32x128xbf16>
    %c0_6 = arith.constant 0 : index
    %c0_7 = arith.constant 0 : index
    %10 = vector.load %arg4[%c0_6, %c0_7] : memref<128x256xbf16, #tpu.memory_space<vmem>>, vector<128x256xbf16>
    %cst_8 = arith.constant dense<0.000000e+00> : vector<32x256xf32>
    %11 = tpu.matmul %9, %10, %cst_8 {dimension_numbers = #tpu.dot_dimension_numbers<[1], [0], [0], [1], [0, 0, 1, 1], [], []>} : vector<32x128xbf16>, vector<128x256xbf16>, vector<32x256xf32> -> vector<32x256xf32>
    %c0_9 = arith.constant 0 : index
    %c0_10 = arith.constant 0 : index
    %12 = vector.load %arg5[%c0_9, %c0_10] : memref<1x256xf32, #tpu.memory_space<vmem>>, vector<1x256xf32>
    %13 = vector.broadcast %12 : vector<1x256xf32> to vector<32x256xf32>
    %14 = arith.addf %11, %13 : vector<32x256xf32>
    %cst_11 = arith.constant 0.000000e+00 : f32
    %15 = vector.broadcast %cst_11 : f32 to vector<32x256xf32>
    %16 = arith.maximumf %14, %15 : vector<32x256xf32>
    %17 = arith.truncf %16 : vector<32x256xf32> to vector<32x256xbf16>
    %c0_12 = arith.constant 0 : index
    %c0_13 = arith.constant 0 : index
    %18 = vector.load %arg6[%c0_12, %c0_13] : memref<256x64xbf16, #tpu.memory_space<vmem>>, vector<256x64xbf16>
    %cst_14 = arith.constant dense<0.000000e+00> : vector<32x64xf32>
    %19 = tpu.matmul %17, %18, %cst_14 {dimension_numbers = #tpu.dot_dimension_numbers<[1], [0], [0], [1], [0, 0, 1, 1], [], []>} : vector<32x256xbf16>, vector<256x64xbf16>, vector<32x64xf32> -> vector<32x64xf32>
    %c0_15 = arith.constant 0 : index
    %c0_16 = arith.constant 0 : index
    %20 = vector.load %arg7[%c0_15, %c0_16] : memref<1x64xf32, #tpu.memory_space<vmem>>, vector<1x64xf32>
    %21 = vector.broadcast %20 : vector<1x64xf32> to vector<32x64xf32>
    %22 = arith.addf %19, %21 : vector<32x64xf32>
    %cst_17 = arith.constant 0.000000e+00 : f32
    %23 = vector.broadcast %cst_17 : f32 to vector<32x64xf32>
    %24 = arith.maximumf %22, %23 : vector<32x64xf32>
    %25 = arith.truncf %24 : vector<32x64xf32> to vector<32x64xbf16>
    %c0_18 = arith.constant 0 : index
    %c0_19 = arith.constant 0 : index
    %26 = vector.load %arg8[%c0_18, %c0_19] : memref<1x64xbf16, #tpu.memory_space<vmem>>, vector<1x64xbf16>
    %cst_20 = arith.constant dense<0.000000e+00> : vector<1x32xf32>
    %27 = tpu.matmul %26, %25, %cst_20 {dimension_numbers = #tpu.dot_dimension_numbers<[1], [1], [0], [0], [0, 0, 1, 0], [], []>} : vector<1x64xbf16>, vector<32x64xbf16>, vector<1x32xf32> -> vector<1x32xf32>
    %c0_21 = arith.constant 0 : index
    %c0_22 = arith.constant 0 : index
    %28 = vector.load %arg9[%c0_21, %c0_22] : memref<1x1xf32, #tpu.memory_space<vmem>>, vector<1x1xf32>
    %29 = vector.broadcast %28 : vector<1x1xf32> to vector<1x32xf32>
    %30 = arith.addf %27, %29 : vector<1x32xf32>
    %c0_23 = arith.constant 0 : index
    %c0_24 = arith.constant 0 : index
    %c0_25 = arith.constant 0 : index
    %31 = vector.load %arg10[%c0_23, %c0_24, %c0_25] : memref<1x1x32xf32, #tpu.memory_space<vmem>>, vector<1x1x32xf32>
    %32 = vector.shape_cast %31 : vector<1x1x32xf32> to vector<1x32xf32>
    %33 = vector.shape_cast %30 : vector<1x32xf32> to vector<1x1x32xf32>
    tpu.vector_store %arg10[%c0_23, %c0_24, %c0_25], %33 {strides = array<i32>} : memref<1x1x32xf32, #tpu.memory_space<vmem>>, vector<1x1x32xf32>,
    return
  }
  func.func @transform_0(%arg0: i32) -> (i32, i32) {
    %c0_i32 = arith.constant 0 : i32
    %c0_i32_0 = arith.constant 0 : i32
    return %arg0, %c0_i32 : i32, i32
  }
  func.func @transform_1(%arg0: i32) -> (i32, i32) {
    %c0_i32 = arith.constant 0 : i32
    %c0_i32_0 = arith.constant 0 : i32
    %c0_i32_1 = arith.constant 0 : i32
    return %c0_i32, %c0_i32_0 : i32, i32
  }
  func.func @transform_2(%arg0: i32) -> (i32, i32) {
    %c0_i32 = arith.constant 0 : i32
    %c0_i32_0 = arith.constant 0 : i32
    %c0_i32_1 = arith.constant 0 : i32
    return %c0_i32, %c0_i32_0 : i32, i32
  }
  func.func @transform_3(%arg0: i32) -> (i32, i32) {
    %c0_i32 = arith.constant 0 : i32
    %c0_i32_0 = arith.constant 0 : i32
    %c0_i32_1 = arith.constant 0 : i32
    return %c0_i32, %c0_i32_0 : i32, i32
  }
  func.func @transform_4(%arg0: i32) -> (i32, i32) {
    %c0_i32 = arith.constant 0 : i32
    %c0_i32_0 = arith.constant 0 : i32
    %c0_i32_1 = arith.constant 0 : i32
    return %c0_i32, %c0_i32_0 : i32, i32
  }
  func.func @transform_5(%arg0: i32) -> (i32, i32) {
    %c0_i32 = arith.constant 0 : i32
    %c0_i32_0 = arith.constant 0 : i32
    %c0_i32_1 = arith.constant 0 : i32
    return %c0_i32, %c0_i32_0 : i32, i32
  }
  func.func @transform_6(%arg0: i32) -> (i32, i32) {
    %c0_i32 = arith.constant 0 : i32
    %c0_i32_0 = arith.constant 0 : i32
    %c0_i32_1 = arith.constant 0 : i32
    return %c0_i32, %c0_i32_0 : i32, i32
  }
  func.func @transform_7(%arg0: i32) -> (i32, i32) {
    %c0_i32 = arith.constant 0 : i32
    %c0_i32_0 = arith.constant 0 : i32
    %c0_i32_1 = arith.constant 0 : i32
    return %c0_i32, %c0_i32_0 : i32, i32
  }
  func.func @transform_8(%arg0: i32) -> (i32, i32) {
    %c0_i32 = arith.constant 0 : i32
    %c0_i32_0 = arith.constant 0 : i32
    %c0_i32_1 = arith.constant 0 : i32
    return %c0_i32, %c0_i32_0 : i32, i32
  }
  func.func @transform_9(%arg0: i32) -> (i32, i32, i32) {
    %c0_i32 = arith.constant 0 : i32
    %c0_i32_0 = arith.constant 0 : i32
    %c0_i32_1 = arith.constant 0 : i32
    return %arg0, %c0_i32, %c0_i32_0 : i32, i32, i32
  }
}

</mosaic_0001>

<llo_original>
// kernel: tpu_custom_call.1
$region0: #{tpu_custom_call.1}
  #allocation0 [shape = 'u32[]', space=smem, size = 0x4, offset = 0x4, fixed_abs, tag = 'smem constant byte address 0x4 - core index']
  #allocation1 [shape = 'u32[144,128]{1,0:T(1,128)}', space=vmem, size = 0x12000, scoped, tag = 'internal scratch']
  #allocation2 [shape = 'f32[1,1]{1,0:T(1,128)S(1)}', space=vmem, size = 0x200, scoped, tag = 'scoped memory for tpu_custom_call.1']
  %s0 = inlined_call_operand.vmem [shape: f32[64,32], index: 0, kind: input, shape index: {}]
  %s1 = inlined_call_operand.vmem [shape: bf16[32,128], index: 1, kind: input, shape index: {}]
  %s2 = inlined_call_operand.vmem [shape: f32[1,128], index: 2, kind: input, shape index: {}]
  %s3 = inlined_call_operand.vmem [shape: bf16[128,256], index: 3, kind: input, shape index: {}]
  %s4 = inlined_call_operand.vmem [shape: f32[1,256], index: 4, kind: input, shape index: {}]
  %s5 = inlined_call_operand.vmem [shape: bf16[256,64], index: 5, kind: input, shape index: {}]
  %s6 = inlined_call_operand.vmem [shape: f32[1,64], index: 6, kind: input, shape index: {}]
  %s7 = inlined_call_operand.vmem [shape: bf16[1,64], index: 7, kind: input, shape index: {}]
  %s8 = inlined_call_operand.<no memory space> [shape: f32[1,1], index: 8, kind: input, shape index: {}]
  %s9 = inlined_call_operand.hbm [shape: f32[2,1,32], index: 9, kind: output, shape index: {}]
  %s10 = sld [smem:[#allocation0]]
  $region69: #{tpu_custom_call.1} parent=0
    _
  %s12 = ssub.s32 1, %s10
  %s13 = scalar_select 0, %s12, %s10
  %v14 = vstv %s8
  %15 = vst [vmem:[#allocation2] sm:$0x1] %v14
  $region1: #{tpu_custom_call.1} parent=0
    #allocation3 [shape = 'u8[1024]{0}', space=vmem, size = 0x400, scoped, tag = 'output window, operand 0']
    #allocation4 [shape = 's32[2]{0}', space=sflag, size = 0x8, scoped, tag = 'scoped memory for tpu_custom_call.1']
    %16 = vsyncpa [#allocation4], 0
    %s17 = scalar_lea.sflag [#allocation4], 1
    %18 = vsyncpa %s17, 0
    loop: start=0, step=1, limit=4
    $region2: #{tpu_custom_call.1} parent=1 // loop_pre_header
      _
    $region3: #{tpu_custom_call.1} parent=1 // loop_header
      %s20 = sphi 0, %s24
      %p21 = scmp.ge.s32.totalorder %s20, 4
      %s30 = sphi 0, %s32
      %s33 = sphi 0, %s30
      %s34 = sphi 0, %s33
      %s50 = sphi 0, %s34
      %s54 = sphi 0, %s54
      %s56 = sphi 0, %s54
      %s57 = sphi 0, %s56
      %s71 = sphi 0, %s57
      %s75 = sphi 0, %s75
      %s77 = sphi 0, %s75
      %s78 = sphi 0, %s77
      %s92 = sphi 0, %s78
      %s96 = sphi 0, %s96
      %s98 = sphi 0, %s96
      %s99 = sphi 0, %s98
      %s113 = sphi 0, %s99
      %s117 = sphi 0, %s117
      %s119 = sphi 0, %s117
      %s120 = sphi 0, %s119
      %s134 = sphi 0, %s120
      %s138 = sphi 0, %s138
      %s140 = sphi 0, %s138
      %s141 = sphi 0, %s140
      %s155 = sphi 0, %s141
      %s159 = sphi 0, %s159
      %s161 = sphi 0, %s159
      %s162 = sphi 0, %s161
      %s176 = sphi 0, %s162
      %s180 = sphi 0, %s180
      %s182 = sphi 0, %s180
      %s183 = sphi 0, %s182
      %s197 = sphi 0, %s183
      %s201 = sphi 0, %s201
      %s203 = sphi 0, %s201
      %s204 = sphi 0, %s203
      %s218 = sphi 0, %s204
      %s224 = sphi 0, %s226
      %s227 = sphi 0, %s224
      %s228 = sphi 0, %s227
      %s244 = sphi 0, %s228
    $region4: #{tpu_custom_call.1} parent=1 // loop_header_branch
      %23 = sbr.rel (%p21) target = $region8
    $region5: #{tpu_custom_call.1} parent=1 // loop_body
      %s25 = ssub.s32 %s20, 1
      %s26 = ssub.s32 %s20, 2
      %s27 = sadd.s32 %s20, 1
      %s28 = ssub.s32 %s20, %s27
      %p29 = scmp.eq.s32.totalorder %s28, 0
      %s31 = sadd.s32 %s30, 1
      %s32 = scalar_select %p29, %s30, %s31
      %p35 = pneg %p29
      %p36 = scmp.eq.s32.totalorder %s20, 1
      %p37 = por %p35, %p36
      %p38 = scmp.ne.s32.totalorder %s30, %s33
      %p39 = scmp.eq.s32.totalorder %s20, 0
      %p40 = por %p38, %p39
      %p41 = scmp.ne.s32.totalorder %s30, %s33
      %p42 = scmp.eq.s32.totalorder %s25, 1
      %p43 = por %p41, %p42
      %p44 = scmp.ne.s32.totalorder %s33, %s34
      %p45 = scmp.eq.s32.totalorder %s25, 0
      %p46 = por %p44, %p45
      %p47 = scmp.ne.s32.totalorder %s33, %s34
      %p48 = scmp.eq.s32.totalorder %s26, 1
      %p49 = por %p47, %p48
      %p51 = scmp.ne.s32.totalorder %s34, %s50
      %p52 = scmp.eq.s32.totalorder %s26, 0
      %p53 = por %p51, %p52
      %s55 = sadd.s32 %s54, 1
      %p58 = scmp.eq.s32.totalorder %s20, 1
      %p59 = scmp.ne.s32.totalorder %s54, %s56
      %p60 = scmp.eq.s32.totalorder %s20, 0
      %p61 = por %p59, %p60
      %p62 = scmp.ne.s32.totalorder %s54, %s56
      %p63 = scmp.eq.s32.totalorder %s25, 1
      %p64 = por %p62, %p63
      %p65 = scmp.ne.s32.totalorder %s56, %s57
      %p66 = scmp.eq.s32.totalorder %s25, 0
      %p67 = por %p65, %p66
      %p68 = scmp.ne.s32.totalorder %s56, %s57
      %p69 = scmp.eq.s32.totalorder %s26, 1
      %p70 = por %p68, %p69
      %p72 = scmp.ne.s32.totalorder %s57, %s71
      %p73 = scmp.eq.s32.totalorder %s26, 0
      %p74 = por %p72, %p73
      %s76 = sadd.s32 %s75, 1
      %p79 = scmp.eq.s32.totalorder %s20, 1
      %p80 = scmp.ne.s32.totalorder %s75, %s77
      %p81 = scmp.eq.s32.totalorder %s20, 0
      %p82 = por %p80, %p81
      %p83 = scmp.ne.s32.totalorder %s75, %s77
      %p84 = scmp.eq.s32.totalorder %s25, 1
      %p85 = por %p83, %p84
      %p86 = scmp.ne.s32.totalorder %s77, %s78
      %p87 = scmp.eq.s32.totalorder %s25, 0
      %p88 = por %p86, %p87
      %p89 = scmp.ne.s32.totalorder %s77, %s78
      %p90 = scmp.eq.s32.totalorder %s26, 1
      %p91 = por %p89, %p90
      %p93 = scmp.ne.s32.totalorder %s78, %s92
      %p94 = scmp.eq.s32.totalorder %s26, 0
      %p95 = por %p93, %p94
      %s97 = sadd.s32 %s96, 1
      %p100 = scmp.eq.s32.totalorder %s20, 1
      %p101 = scmp.ne.s32.totalorder %s96, %s98
      %p102 = scmp.eq.s32.totalorder %s20, 0
      %p103 = por %p101, %p102
      %p104 = scmp.ne.s32.totalorder %s96, %s98
      %p105 = scmp.eq.s32.totalorder %s25, 1
      %p106 = por %p104, %p105
      %p107 = scmp.ne.s32.totalorder %s98, %s99
      %p108 = scmp.eq.s32.totalorder %s25, 0
      %p109 = por %p107, %p108
      %p110 = scmp.ne.s32.totalorder %s98, %s99
      %p111 = scmp.eq.s32.totalorder %s26, 1
      %p112 = por %p110, %p111
      %p114 = scmp.ne.s32.totalorder %s99, %s113
      %p115 = scmp.eq.s32.totalorder %s26, 0
      %p116 = por %p114, %p115
      %s118 = sadd.s32 %s117, 1
      %p121 = scmp.eq.s32.totalorder %s20, 1
      %p122 = scmp.ne.s32.totalorder %s117, %s119
      %p123 = scmp.eq.s32.totalorder %s20, 0
      %p124 = por %p122, %p123
      %p125 = scmp.ne.s32.totalorder %s117, %s119
      %p126 = scmp.eq.s32.totalorder %s25, 1
      %p127 = por %p125, %p126
      %p128 = scmp.ne.s32.totalorder %s119, %s120
      %p129 = scmp.eq.s32.totalorder %s25, 0
      %p130 = por %p128, %p129
      %p131 = scmp.ne.s32.totalorder %s119, %s120
      %p132 = scmp.eq.s32.totalorder %s26, 1
      %p133 = por %p131, %p132
      %p135 = scmp.ne.s32.totalorder %s120, %s134
      %p136 = scmp.eq.s32.totalorder %s26, 0
      %p137 = por %p135, %p136
      %s139 = sadd.s32 %s138, 1
      %p142 = scmp.eq.s32.totalorder %s20, 1
      %p143 = scmp.ne.s32.totalorder %s138, %s140
      %p144 = scmp.eq.s32.totalorder %s20, 0
      %p145 = por %p143, %p144
      %p146 = scmp.ne.s32.totalorder %s138, %s140
      %p147 = scmp.eq.s32.totalorder %s25, 1
      %p148 = por %p146, %p147
      %p149 = scmp.ne.s32.totalorder %s140, %s141
      %p150 = scmp.eq.s32.totalorder %s25, 0
      %p151 = por %p149, %p150
      %p152 = scmp.ne.s32.totalorder %s140, %s141
      %p153 = scmp.eq.s32.totalorder %s26, 1
      %p154 = por %p152, %p153
      %p156 = scmp.ne.s32.totalorder %s141, %s155
      %p157 = scmp.eq.s32.totalorder %s26, 0
      %p158 = por %p156, %p157
      %s160 = sadd.s32 %s159, 1
      %p163 = scmp.eq.s32.totalorder %s20, 1
      %p164 = scmp.ne.s32.totalorder %s159, %s161
      %p165 = scmp.eq.s32.totalorder %s20, 0
      %p166 = por %p164, %p165
      %p167 = scmp.ne.s32.totalorder %s159, %s161
      %p168 = scmp.eq.s32.totalorder %s25, 1
      %p169 = por %p167, %p168
      %p170 = scmp.ne.s32.totalorder %s161, %s162
      %p171 = scmp.eq.s32.totalorder %s25, 0
      %p172 = por %p170, %p171
      %p173 = scmp.ne.s32.totalorder %s161, %s162
      %p174 = scmp.eq.s32.totalorder %s26, 1
      %p175 = por %p173, %p174
      %p177 = scmp.ne.s32.totalorder %s162, %s176
      %p178 = scmp.eq.s32.totalorder %s26, 0
      %p179 = por %p177, %p178
      %s181 = sadd.s32 %s180, 1
      %p184 = scmp.eq.s32.totalorder %s20, 1
      %p185 = scmp.ne.s32.totalorder %s180, %s182
      %p186 = scmp.eq.s32.totalorder %s20, 0
      %p187 = por %p185, %p186
      %p188 = scmp.ne.s32.totalorder %s180, %s182
      %p189 = scmp.eq.s32.totalorder %s25, 1
      %p190 = por %p188, %p189
      %p191 = scmp.ne.s32.totalorder %s182, %s183
      %p192 = scmp.eq.s32.totalorder %s25, 0
      %p193 = por %p191, %p192
      %p194 = scmp.ne.s32.totalorder %s182, %s183
      %p195 = scmp.eq.s32.totalorder %s26, 1
      %p196 = por %p194, %p195
      %p198 = scmp.ne.s32.totalorder %s183, %s197
      %p199 = scmp.eq.s32.totalorder %s26, 0
      %p200 = por %p198, %p199
      %s202 = sadd.s32 %s201, 1
      %p205 = scmp.eq.s32.totalorder %s20, 1
      %p206 = scmp.ne.s32.totalorder %s201, %s203
      %p207 = scmp.eq.s32.totalorder %s20, 0
      %p208 = por %p206, %p207
      %p209 = scmp.ne.s32.totalorder %s201, %s203
      %p210 = scmp.eq.s32.totalorder %s25, 1
      %p211 = por %p209, %p210
      %p212 = scmp.ne.s32.totalorder %s203, %s204
      %p213 = scmp.eq.s32.totalorder %s25, 0
      %p214 = por %p212, %p213
      %p215 = scmp.ne.s32.totalorder %s203, %s204
      %p216 = scmp.eq.s32.totalorder %s26, 1
      %p217 = por %p215, %p216
      %p219 = scmp.ne.s32.totalorder %s204, %s218
      %p220 = scmp.eq.s32.totalorder %s26, 0
      %p221 = por %p219, %p220
      %s222 = ssub.s32 %s20, %s27
      %p223 = scmp.eq.s32.totalorder %s222, 0
      %s225 = sadd.s32 %s224, 1
      %s226 = scalar_select %p223, %s224, %s225
      %p229 = pneg %p223
      %p230 = scmp.eq.s32.totalorder %s20, 1
      %p231 = por %p229, %p230
      %p232 = scmp.ne.s32.totalorder %s224, %s227
      %p233 = scmp.eq.s32.totalorder %s20, 0
      %p234 = por %p232, %p233
      %p235 = scmp.ne.s32.totalorder %s224, %s227
      %p236 = scmp.eq.s32.totalorder %s25, 1
      %p237 = por %p235, %p236
      %p238 = scmp.ne.s32.totalorder %s227, %s228
      %p239 = scmp.eq.s32.totalorder %s25, 0
      %p240 = por %p238, %p239
      %p241 = scmp.ne.s32.totalorder %s227, %s228
      %p242 = scmp.eq.s32.totalorder %s26, 1
      %p243 = por %p241, %p242
      %p245 = scmp.ne.s32.totalorder %s228, %s244
      %p246 = scmp.eq.s32.totalorder %s26, 0
      %p247 = por %p245, %p246
      %p248 = scmp.le.s32.totalorder 1, %s20
      %p249 = scmp.lt.s32.totalorder %s20, 3
      %p250 = pnand %p248, %p249
      %p251 = pneg %p250
      // Predicated region
      $region9: #{tpu_custom_call.1} parent=5 // pred_check
        _
      $region10: #{tpu_custom_call.1} parent=5 // pred_check_branch
        %253 = sbr.rel (%p250) target = $region12
      $region11: #{tpu_custom_call.1} parent=5 // pred_region
        %s254 = ssub.s32 %s20, 1
        // Predicated region
        $region13: #{tpu_custom_call.1} parent=11 // pred_check
          %p255 = pneg %p67
        $region14: #{tpu_custom_call.1} parent=11 // pred_check_branch
          %257 = sbr.rel (%p255) target = $region16
        $region15: #{tpu_custom_call.1} parent=11 // pred_region
          _
        $region16: #{tpu_custom_call.1} parent=11 // pred_fallthru
          _
        // Predicated region
        $region17: #{tpu_custom_call.1} parent=11 // pred_check
          %p258 = pneg %p88
        $region18: #{tpu_custom_call.1} parent=11 // pred_check_branch
          %260 = sbr.rel (%p258) target = $region20
        $region19: #{tpu_custom_call.1} parent=11 // pred_region
          _
        $region20: #{tpu_custom_call.1} parent=11 // pred_fallthru
          _
        // Predicated region
        $region21: #{tpu_custom_call.1} parent=11 // pred_check
          %p261 = pneg %p109
        $region22: #{tpu_custom_call.1} parent=11 // pred_check_branch
          %263 = sbr.rel (%p261) target = $region24
        $region23: #{tpu_custom_call.1} parent=11 // pred_region
          _
        $region24: #{tpu_custom_call.1} parent=11 // pred_fallthru
          _
        // Predicated region
        $region25: #{tpu_custom_call.1} parent=11 // pred_check
          %p264 = pneg %p130
        $region26: #{tpu_custom_call.1} parent=11 // pred_check_branch
          %266 = sbr.rel (%p264) target = $region28
        $region27: #{tpu_custom_call.1} parent=11 // pred_region
          _
        $region28: #{tpu_custom_call.1} parent=11 // pred_fallthru
          _
        // Predicated region
        $region29: #{tpu_custom_call.1} parent=11 // pred_check
          %p267 = pneg %p151
        $region30: #{tpu_custom_call.1} parent=11 // pred_check_branch
          %269 = sbr.rel (%p267) target = $region32
        $region31: #{tpu_custom_call.1} parent=11 // pred_region
          _
        $region32: #{tpu_custom_call.1} parent=11 // pred_fallthru
          _
        // Predicated region
        $region33: #{tpu_custom_call.1} parent=11 // pred_check
          %p270 = pneg %p172
        $region34: #{tpu_custom_call.1} parent=11 // pred_check_branch
          %272 = sbr.rel (%p270) target = $region36
        $region35: #{tpu_custom_call.1} parent=11 // pred_region
          _
        $region36: #{tpu_custom_call.1} parent=11 // pred_fallthru
          _
        // Predicated region
        $region37: #{tpu_custom_call.1} parent=11 // pred_check
          %p273 = pneg %p193
        $region38: #{tpu_custom_call.1} parent=11 // pred_check_branch
          %275 = sbr.rel (%p273) target = $region40
        $region39: #{tpu_custom_call.1} parent=11 // pred_region
          _
        $region40: #{tpu_custom_call.1} parent=11 // pred_fallthru
          _
        // Predicated region
        $region41: #{tpu_custom_call.1} parent=11 // pred_check
          %p276 = pneg %p214
        $region42: #{tpu_custom_call.1} parent=11 // pred_check_branch
          %278 = sbr.rel (%p276) target = $region44
        $region43: #{tpu_custom_call.1} parent=11 // pred_region
          _
        $region44: #{tpu_custom_call.1} parent=11 // pred_fallthru
          _
      $region12: #{tpu_custom_call.1} parent=5 // pred_fallthru
        _
      %p279 = scmp.lt.s32.totalorder %s20, 2
      // Predicated region
      $region45: #{tpu_custom_call.1} parent=5 // pred_check
        %p280 = pneg %p279
      $region46: #{tpu_custom_call.1} parent=5 // pred_check_branch
        %282 = sbr.rel (%p280) target = $region48
      $region47: #{tpu_custom_call.1} parent=5 // pred_region
        // Predicated region
        $region49: #{tpu_custom_call.1} parent=47 // pred_check
          %p283 = pneg %p40
        $region50: #{tpu_custom_call.1} parent=47 // pred_check_branch
          %285 = sbr.rel (%p283) target = $region52
        $region51: #{tpu_custom_call.1} parent=47 // pred_region
          %s286 = smul.u32 4, %s20
          %p287 = scmp.lt.s32.totalorder %s286, 7
          %s288 = scalar_select %p287, %s286, 7
          %s289 = smul.addr %s288, 8
          %s290 = scalar_lea.vmem %s0, %s289
          %s291 = smul.u32 4, %s20
        $region52: #{tpu_custom_call.1} parent=47 // pred_fallthru
          _
      $region48: #{tpu_custom_call.1} parent=5 // pred_fallthru
        _
      %p292 = scmp.le.s32.totalorder 1, %s20
      %p293 = scmp.lt.s32.totalorder %s20, 3
      %p294 = pnand %p292, %p293
      %p295 = pneg %p294
      // Predicated region
      $region53: #{tpu_custom_call.1} parent=5 // pred_check
        _
      $region54: #{tpu_custom_call.1} parent=5 // pred_check_branch
        %297 = sbr.rel (%p294) target = $region56
      $region55: #{tpu_custom_call.1} parent=5 // pred_region
        %s298 = ssub.s32 %s20, 1
        %s299 = smul.u32 4, %s25
        %p300 = scmp.lt.s32.totalorder %s299, 7
        %s301 = scalar_select %p300, %s299, 7
        %s302 = smul.addr %s301, 8
        %s303 = scalar_lea.vmem %s0, %s302
        %p304 = pneg %p46
        %p305 = pneg %p43
        %p306 = pneg %p67
        %p307 = pneg %p64
        %p308 = pneg %p88
        %p309 = pneg %p85
        %p310 = pneg %p109
        %p311 = pneg %p106
        %p312 = pneg %p130
        %p313 = pneg %p127
        %p314 = pneg %p151
        %p315 = pneg %p148
        %p316 = pneg %p172
        %p317 = pneg %p169
        %p318 = pneg %p193
        %p319 = pneg %p190
        %p320 = pneg %p214
        %p321 = pneg %p211
        %p322 = pneg %p240
        %p323 = pneg %p237
        %s324 = sand.u32 %s227, 1
        %s325 = scalar_lea.sflag [#allocation4], %s324
        %s326 = sand.u32 %s227, 1
        %s327 = scalar_lea.vmem [#allocation3], %s326
        %s328 = smul.u32 4, %s25
        %p329 = scmp.lt.s32.totalorder %s328, 7
        %s330 = scalar_select %p329, %s328, 7
        %s331 = smul.addr %s330, 8
        %s332 = scalar_lea.vmem %s0, %s331
        %s333 = smul.u32 4, %s25
        %v335 = vld [vmem:[%s332] sm:$0xff]
        %v336 = vld [vmem:[%s332 + $0x8] sm:$0xff]
        %v337 = vld [vmem:[%s332 + $0x10] sm:$0xff]
        %v338 = vld [vmem:[%s332 + $0x18] sm:$0xff]
        %v339 = vpack.c.bf16 %v336, %v335
        %v340 = vpack.c.bf16 %v338, %v337
        %v341 = vld [vmem:[%s1] sm:$0xf]
        %v342 = vld [vmem:[%s1 + $0x4] sm:$0xf]
        %v343 = vld [vmem:[%s1 + $0x8] sm:$0xf]
        %v344 = vld [vmem:[%s1 + $0xc] sm:$0xf]
        %v345 = vld [vmem:[%s2] sm:$0x1]
        %v347 = vlaneseq
        %v348 = vshrl.u32 %v347, 7
        %v349 = vsub.s32 0, %v348
        %v350 = vrot.slane %v345, %v349
        %v356 = vunpack.c.l.b16 %v341
        %v357 = vunpack.c.l.b16 %v342
        %v358 = vunpack.c.l.b16 %v343
        %v359 = vunpack.c.l.b16 %v344
        %v360 = vpack.c.b16 %v357, %v356
        %v361 = vpack.c.b16 %v359, %v358
        %vm364 = vcmask 261120
        %v366 = vsel %vm364, %v339, 0
        %v369 = vsel %vm364, %v340, 0
        %371 = vmatprep.subr.bf16.mxu0 0
        %372 = vmatpush1.bf16.msra.mxu0 0
        %373 = vmatprep.subr.bf16.mxu0 0
        %374 = vmatpush1.bf16.msra.mxu0 0
        %375 = vmatprep.subr.bf16.mxu0 0
        %376 = vmatpush1.bf16.msra.mxu0 0
        %377 = vmatprep.subr.bf16.mxu0 0
        %378 = vmatpush1.bf16.msra.mxu0 0
        %379 = vmatprep.subr.bf16.mxu0 0
        %380 = vmatpush1.bf16.msra.mxu0 0
        %381 = vmatprep.subr.bf16.mxu0 0
        %382 = vmatpush1.bf16.msra.mxu0 0
        %383 = vmatprep.subr.bf16.mxu0 0
        %384 = vmatpush1.bf16.msra.mxu0 %v361
        %385 = vmatprep.subr.bf16.mxu0 0
        %386 = vmatpush1.bf16.msra.mxu0 %v360
        %387 = vmatprep.subr.bf16.mxu0 0
        %388 = vmatpush2.bf16.msra.mxu0 0
        %389 = vmatprep.subr.bf16.mxu0 0
        %390 = vmatpush2.bf16.msra.mxu0 0
        %391 = vmatprep.subr.bf16.mxu0 0
        %392 = vmatpush2.bf16.msra.mxu0 0
        %393 = vmatprep.subr.bf16.mxu0 0
        %394 = vmatpush2.bf16.msra.mxu0 0
        %395 = vmatprep.subr.bf16.mxu0 0
        %396 = vmatpush2.bf16.msra.mxu0 0
        %397 = vmatprep.subr.bf16.mxu0 0
        %398 = vmatpush2.bf16.msra.mxu0 0
        %399 = vmatprep.subr.bf16.mxu0 0
        %400 = vmatpush2.bf16.msra.mxu0 0
        %401 = vmatprep.subr.bf16.mxu0 0
        %402 = vmatpush2.bf16.msra.mxu0 0
        %403 = vmatprep.mubr.bf16.mxu0 0
        %404 = vmatmul.mubr.bf16.gmra.mxu0 %v366
        %v405 = vpop.f32.mrf.mxu0
        %v406 = vadd.f32 %v350, %v405
        %v407 = vpop.f32.mrf.mxu0
        %v408 = vpop.f32.mrf.mxu0
        %v409 = vadd.f32 %v350, %v408
        %v410 = vpop.f32.mrf.mxu0
        %411 = vmatprep.mubr.bf16.mxu0 0
        %412 = vmatmul.mubr.bf16.gmra.mxu0 %v369
        %v413 = vpop.f32.mrf.mxu0
        %v414 = vadd.f32 %v350, %v413
        %v415 = vpop.f32.mrf.mxu0
        %v416 = vpop.f32.mrf.mxu0
        %v417 = vadd.f32 %v350, %v416
        %v418 = vpop.f32.mrf.mxu0
        %419 = vdwg.mxu0
        %v420 = vmax.f32 %v406, 0.0
        %v421 = vmax.f32 %v409, 0.0
        %v422 = vmax.f32 %v414, 0.0
        %v423 = vmax.f32 %v417, 0.0
        %v424 = vpack.c.bf16 %v421, %v420
        %v425 = vpack.c.bf16 %v423, %v422
        %v426 = vld [vmem:[%s3] sm:$0xff]
        %v427 = vld [vmem:[%s3 + $0x8] sm:$0xff]
        %v428 = vld [vmem:[%s3 + $0x10] sm:$0xff]
        %v429 = vld [vmem:[%s3 + $0x18] sm:$0xff]
        %v430 = vld [vmem:[%s3 + $0x20] sm:$0xff]
        %v431 = vld [vmem:[%s3 + $0x28] sm:$0xff]
        %v432 = vld [vmem:[%s3 + $0x30] sm:$0xff]
        %v433 = vld [vmem:[%s3 + $0x38] sm:$0xff]
        %v434 = vld [vmem:[%s3 + $0x40] sm:$0xff]
        %v435 = vld [vmem:[%s3 + $0x48] sm:$0xff]
        %v436 = vld [vmem:[%s3 + $0x50] sm:$0xff]
        %v437 = vld [vmem:[%s3 + $0x58] sm:$0xff]
        %v438 = vld [vmem:[%s3 + $0x60] sm:$0xff]
        %v439 = vld [vmem:[%s3 + $0x68] sm:$0xff]
        %v440 = vld [vmem:[%s3 + $0x70] sm:$0xff]
        %v441 = vld [vmem:[%s3 + $0x78] sm:$0xff]
        %v442 = vld [vmem:[%s4] sm:$0x3]
        %v444 = vlaneseq
        %v445 = vshrl.u32 %v444, 7
        %v446 = vsub.s32 0, %v445
        %v447 = vrot.slane %v442, %v446
        %v448 = vlaneseq
        %v449 = vshrl.u32 %v448, 7
        %v450 = vsub.s32 1, %v449
        %v451 = vrot.slane %v442, %v450
        %v470 = vunpack.c.l.b16 %v426
        %v471 = vunpack.c.h.b16 %v426
        %v472 = vunpack.c.l.b16 %v427
        %v473 = vunpack.c.h.b16 %v427
        %v474 = vunpack.c.l.b16 %v428
        %v475 = vunpack.c.h.b16 %v428
        %v476 = vunpack.c.l.b16 %v429
        %v477 = vunpack.c.h.b16 %v429
        %v478 = vunpack.c.l.b16 %v430
        %v479 = vunpack.c.h.b16 %v430
        %v480 = vunpack.c.l.b16 %v431
        %v481 = vunpack.c.h.b16 %v431
        %v482 = vunpack.c.l.b16 %v432
        %v483 = vunpack.c.h.b16 %v432
        %v484 = vunpack.c.l.b16 %v433
        %v485 = vunpack.c.h.b16 %v433
        %v486 = vunpack.c.l.b16 %v434
        %v487 = vunpack.c.h.b16 %v434
        %v488 = vunpack.c.l.b16 %v435
        %v489 = vunpack.c.h.b16 %v435
        %v490 = vunpack.c.l.b16 %v436
        %v491 = vunpack.c.h.b16 %v436
        %v492 = vunpack.c.l.b16 %v437
        %v493 = vunpack.c.h.b16 %v437
        %v494 = vunpack.c.l.b16 %v438
        %v495 = vunpack.c.h.b16 %v438
        %v496 = vunpack.c.l.b16 %v439
        %v497 = vunpack.c.h.b16 %v439
        %v498 = vunpack.c.l.b16 %v440
        %v499 = vunpack.c.h.b16 %v440
        %v500 = vunpack.c.l.b16 %v441
        %v501 = vunpack.c.h.b16 %v441
        %v502 = vpack.c.b16 %v472, %v470
        %v503 = vpack.c.b16 %v473, %v471
        %v504 = vpack.c.b16 %v476, %v474
        %v505 = vpack.c.b16 %v477, %v475
        %v506 = vpack.c.b16 %v480, %v478
        %v507 = vpack.c.b16 %v481, %v479
        %v508 = vpack.c.b16 %v484, %v482
        %v509 = vpack.c.b16 %v485, %v483
        %v510 = vpack.c.b16 %v488, %v486
        %v511 = vpack.c.b16 %v489, %v487
        %v512 = vpack.c.b16 %v492, %v490
        %v513 = vpack.c.b16 %v493, %v491
        %v514 = vpack.c.b16 %v496, %v494
        %v515 = vpack.c.b16 %v497, %v495
        %v516 = vpack.c.b16 %v500, %v498
        %v517 = vpack.c.b16 %v501, %v499
        %534 = vmatprep.subr.bf16.mxu0 %v517
        %535 = vmatpush1.bf16.msra.mxu0 %v516
        %536 = vmatprep.subr.bf16.mxu0 %v515
        %537 = vmatpush1.bf16.msra.mxu0 %v514
        %538 = vmatprep.subr.bf16.mxu0 %v513
        %539 = vmatpush1.bf16.msra.mxu0 %v512
        %540 = vmatprep.subr.bf16.mxu0 %v511
        %541 = vmatpush1.bf16.msra.mxu0 %v510
        %542 = vmatprep.subr.bf16.mxu0 %v509
        %543 = vmatpush1.bf16.msra.mxu0 %v508
        %544 = vmatprep.subr.bf16.mxu0 %v507
        %545 = vmatpush1.bf16.msra.mxu0 %v506
        %546 = vmatprep.subr.bf16.mxu0 %v505
        %547 = vmatpush1.bf16.msra.mxu0 %v504
        %548 = vmatprep.subr.bf16.mxu0 %v503
        %549 = vmatpush1.bf16.msra.mxu0 %v502
        %550 = vmatprep.subr.bf16.mxu0 0
        %551 = vmatpush2.bf16.msra.mxu0 0
        %552 = vmatprep.subr.bf16.mxu0 0
        %553 = vmatpush2.bf16.msra.mxu0 0
        %554 = vmatprep.subr.bf16.mxu0 0
        %555 = vmatpush2.bf16.msra.mxu0 0
        %556 = vmatprep.subr.bf16.mxu0 0
        %557 = vmatpush2.bf16.msra.mxu0 0
        %558 = vmatprep.subr.bf16.mxu0 0
        %559 = vmatpush2.bf16.msra.mxu0 0
        %560 = vmatprep.subr.bf16.mxu0 0
        %561 = vmatpush2.bf16.msra.mxu0 0
        %562 = vmatprep.subr.bf16.mxu0 0
        %563 = vmatpush2.bf16.msra.mxu0 0
        %564 = vmatprep.subr.bf16.mxu0 0
        %565 = vmatpush2.bf16.msra.mxu0 0
        %566 = vmatprep.mubr.bf16.mxu0 0
        %567 = vmatmul.mubr.bf16.gmra.mxu0 %v424
        %v568 = vpop.f32.mrf.mxu0
        %v569 = vadd.f32 %v447, %v568
        %v570 = vpop.f32.mrf.mxu0
        %v571 = vadd.f32 %v451, %v570
        %v572 = vpop.f32.mrf.mxu0
        %v573 = vadd.f32 %v447, %v572
        %v574 = vpop.f32.mrf.mxu0
        %v575 = vadd.f32 %v451, %v574
        %576 = vmatprep.mubr.bf16.mxu0 0
        %577 = vmatmul.mubr.bf16.gmra.mxu0 %v425
        %v578 = vpop.f32.mrf.mxu0
        %v579 = vadd.f32 %v447, %v578
        %v580 = vpop.f32.mrf.mxu0
        %v581 = vadd.f32 %v451, %v580
        %v582 = vpop.f32.mrf.mxu0
        %v583 = vadd.f32 %v447, %v582
        %v584 = vpop.f32.mrf.mxu0
        %v585 = vadd.f32 %v451, %v584
        %586 = vdwg.mxu0
        %v587 = vmax.f32 %v569, 0.0
        %v588 = vmax.f32 %v571, 0.0
        %v589 = vmax.f32 %v573, 0.0
        %v590 = vmax.f32 %v575, 0.0
        %v591 = vmax.f32 %v579, 0.0
        %v592 = vmax.f32 %v581, 0.0
        %v593 = vmax.f32 %v583, 0.0
        %v594 = vmax.f32 %v585, 0.0
        %v595 = vpack.c.bf16 %v589, %v587
        %v596 = vpack.c.bf16 %v590, %v588
        %v597 = vpack.c.bf16 %v593, %v591
        %v598 = vpack.c.bf16 %v594, %v592
        %v599 = vld [vmem:[%s5] sm:$0xf]
        %v600 = vld [vmem:[%s5 + $0x4] sm:$0xf]
        %v601 = vld [vmem:[%s5 + $0x8] sm:$0xf]
        %v602 = vld [vmem:[%s5 + $0xc] sm:$0xf]
        %v603 = vld [vmem:[%s5 + $0x10] sm:$0xf]
        %v604 = vld [vmem:[%s5 + $0x14] sm:$0xf]
        %v605 = vld [vmem:[%s5 + $0x18] sm:$0xf]
        %v606 = vld [vmem:[%s5 + $0x1c] sm:$0xf]
        %v607 = vld [vmem:[%s5 + $0x20] sm:$0xf]
        %v608 = vld [vmem:[%s5 + $0x24] sm:$0xf]
        %v609 = vld [vmem:[%s5 + $0x28] sm:$0xf]
        %v610 = vld [vmem:[%s5 + $0x2c] sm:$0xf]
        %v611 = vld [vmem:[%s5 + $0x30] sm:$0xf]
        %v612 = vld [vmem:[%s5 + $0x34] sm:$0xf]
        %v613 = vld [vmem:[%s5 + $0x38] sm:$0xf]
        %v614 = vld [vmem:[%s5 + $0x3c] sm:$0xf]
        %v615 = vld [vmem:[%s5 + $0x40] sm:$0xf]
        %v616 = vld [vmem:[%s5 + $0x44] sm:$0xf]
        %v617 = vld [vmem:[%s5 + $0x48] sm:$0xf]
        %v618 = vld [vmem:[%s5 + $0x4c] sm:$0xf]
        %v619 = vld [vmem:[%s5 + $0x50] sm:$0xf]
        %v620 = vld [vmem:[%s5 + $0x54] sm:$0xf]
        %v621 = vld [vmem:[%s5 + $0x58] sm:$0xf]
        %v622 = vld [vmem:[%s5 + $0x5c] sm:$0xf]
        %v623 = vld [vmem:[%s5 + $0x60] sm:$0xf]
        %v624 = vld [vmem:[%s5 + $0x64] sm:$0xf]
        %v625 = vld [vmem:[%s5 + $0x68] sm:$0xf]
        %v626 = vld [vmem:[%s5 + $0x6c] sm:$0xf]
        %v627 = vld [vmem:[%s5 + $0x70] sm:$0xf]
        %v628 = vld [vmem:[%s5 + $0x74] sm:$0xf]
        %v629 = vld [vmem:[%s5 + $0x78] sm:$0xf]
        %v630 = vld [vmem:[%s5 + $0x7c] sm:$0xf]
        %v631 = vld [vmem:[%s6] sm:$0x1]
        %v633 = vlaneseq
        %v634 = vshrl.u32 %v633, 7
        %v635 = vsub.s32 0, %v634
        %v636 = vrot.slane %v631, %v635
        %v670 = vunpack.c.l.b16 %v599
        %v671 = vunpack.c.l.b16 %v600
        %v672 = vunpack.c.l.b16 %v601
        %v673 = vunpack.c.l.b16 %v602
        %v674 = vunpack.c.l.b16 %v603
        %v675 = vunpack.c.l.b16 %v604
        %v676 = vunpack.c.l.b16 %v605
        %v677 = vunpack.c.l.b16 %v606
        %v678 = vunpack.c.l.b16 %v607
        %v679 = vunpack.c.l.b16 %v608
        %v680 = vunpack.c.l.b16 %v609
        %v681 = vunpack.c.l.b16 %v610
        %v682 = vunpack.c.l.b16 %v611
        %v683 = vunpack.c.l.b16 %v612
        %v684 = vunpack.c.l.b16 %v613
        %v685 = vunpack.c.l.b16 %v614
        %v686 = vunpack.c.l.b16 %v615
        %v687 = vunpack.c.l.b16 %v616
        %v688 = vunpack.c.l.b16 %v617
        %v689 = vunpack.c.l.b16 %v618
        %v690 = vunpack.c.l.b16 %v619
        %v691 = vunpack.c.l.b16 %v620
        %v692 = vunpack.c.l.b16 %v621
        %v693 = vunpack.c.l.b16 %v622
        %v694 = vunpack.c.l.b16 %v623
        %v695 = vunpack.c.l.b16 %v624
        %v696 = vunpack.c.l.b16 %v625
        %v697 = vunpack.c.l.b16 %v626
        %v698 = vunpack.c.l.b16 %v627
        %v699 = vunpack.c.l.b16 %v628
        %v700 = vunpack.c.l.b16 %v629
        %v701 = vunpack.c.l.b16 %v630
        %v702 = vpack.c.b16 %v671, %v670
        %v703 = vpack.c.b16 %v673, %v672
        %v704 = vpack.c.b16 %v675, %v674
        %v705 = vpack.c.b16 %v677, %v676
        %v706 = vpack.c.b16 %v679, %v678
        %v707 = vpack.c.b16 %v681, %v680
        %v708 = vpack.c.b16 %v683, %v682
        %v709 = vpack.c.b16 %v685, %v684
        %v710 = vpack.c.b16 %v687, %v686
        %v711 = vpack.c.b16 %v689, %v688
        %v712 = vpack.c.b16 %v691, %v690
        %v713 = vpack.c.b16 %v693, %v692
        %v714 = vpack.c.b16 %v695, %v694
        %v715 = vpack.c.b16 %v697, %v696
        %v716 = vpack.c.b16 %v699, %v698
        %v717 = vpack.c.b16 %v701, %v700
        %734 = vmatprep.subr.bf16.mxu0 0
        %735 = vmatpush1.bf16.msra.mxu0 %v709
        %736 = vmatprep.subr.bf16.mxu0 0
        %737 = vmatpush1.bf16.msra.mxu0 %v708
        %738 = vmatprep.subr.bf16.mxu0 0
        %739 = vmatpush1.bf16.msra.mxu0 %v707
        %740 = vmatprep.subr.bf16.mxu0 0
        %741 = vmatpush1.bf16.msra.mxu0 %v706
        %742 = vmatprep.subr.bf16.mxu0 0
        %743 = vmatpush1.bf16.msra.mxu0 %v705
        %744 = vmatprep.subr.bf16.mxu0 0
        %745 = vmatpush1.bf16.msra.mxu0 %v704
        %746 = vmatprep.subr.bf16.mxu0 0
        %747 = vmatpush1.bf16.msra.mxu0 %v703
        %748 = vmatprep.subr.bf16.mxu0 0
        %749 = vmatpush1.bf16.msra.mxu0 %v702
        %750 = vmatprep.subr.bf16.mxu0 0
        %751 = vmatpush2.bf16.msra.mxu0 %v717
        %752 = vmatprep.subr.bf16.mxu0 0
        %753 = vmatpush2.bf16.msra.mxu0 %v716
        %754 = vmatprep.subr.bf16.mxu0 0
        %755 = vmatpush2.bf16.msra.mxu0 %v715
        %756 = vmatprep.subr.bf16.mxu0 0
        %757 = vmatpush2.bf16.msra.mxu0 %v714
        %758 = vmatprep.subr.bf16.mxu0 0
        %759 = vmatpush2.bf16.msra.mxu0 %v713
        %760 = vmatprep.subr.bf16.mxu0 0
        %761 = vmatpush2.bf16.msra.mxu0 %v712
        %762 = vmatprep.subr.bf16.mxu0 0
        %763 = vmatpush2.bf16.msra.mxu0 %v711
        %764 = vmatprep.subr.bf16.mxu0 0
        %765 = vmatpush2.bf16.msra.mxu0 %v710
        %766 = vmatprep.mubr.bf16.mxu0 %v596
        %767 = vmatmul.mubr.bf16.gmra.mxu0 %v595
        %v768 = vpop.f32.mrf.mxu0
        %v769 = vadd.f32 %v636, %v768
        %v770 = vpop.f32.mrf.mxu0
        %v771 = vpop.f32.mrf.mxu0
        %v772 = vadd.f32 %v636, %v771
        %v773 = vpop.f32.mrf.mxu0
        %774 = vmatprep.mubr.bf16.mxu0 %v598
        %775 = vmatmul.mubr.bf16.gmra.mxu0 %v597
        %v776 = vpop.f32.mrf.mxu0
        %v777 = vadd.f32 %v636, %v776
        %v778 = vpop.f32.mrf.mxu0
        %v779 = vpop.f32.mrf.mxu0
        %v780 = vadd.f32 %v636, %v779
        %v781 = vpop.f32.mrf.mxu0
        %782 = vdwg.mxu0
        %v783 = vmax.f32 %v769, 0.0
        %v784 = vmax.f32 %v772, 0.0
        %v785 = vmax.f32 %v777, 0.0
        %v786 = vmax.f32 %v780, 0.0
        %v787 = vpack.c.bf16 %v784, %v783
        %v788 = vpack.c.bf16 %v786, %v785
        %v789 = vld [vmem:[%s7] sm:$0x1]
        %v790 = vld [vmem:[#allocation2] sm:$0x1]
        %792 = vset.pattern.permute.xlu0 0
        %793 = vperm.xlu0 %792, %v790
        %v794 = vpop.permute.xlu0 %793
        %v796 = vlaneseq
        %v797 = vshrl.u32 %v796, 7
        %v798 = vsub.s32 0, %v797
        %v799 = vrot.slane %v794, %v798
        %vm800 = vcmask 523264
        %v802 = vsel %vm800, %v789, 0
        %v805 = vsel %vm800, %v787, 0
        %v808 = vsel %vm800, %v788, 0
        %810 = vmatprep.subr.bf16.mxu0 0
        %811 = vmatpush1.bf16.xpose.msra.mxu0 0
        %812 = vmatprep.subr.bf16.mxu0 0
        %813 = vmatpush1.bf16.xpose.msra.mxu0 0
        %814 = vmatprep.subr.bf16.mxu0 0
        %815 = vmatpush1.bf16.xpose.msra.mxu0 0
        %816 = vmatprep.subr.bf16.mxu0 0
        %817 = vmatpush1.bf16.xpose.msra.mxu0 0
        %818 = vmatprep.subr.bf16.mxu0 0
        %819 = vmatpush1.bf16.xpose.msra.mxu0 0
        %820 = vmatprep.subr.bf16.mxu0 0
        %821 = vmatpush1.bf16.xpose.msra.mxu0 0
        %822 = vmatprep.subr.bf16.mxu0 0
        %823 = vmatpush1.bf16.xpose.msra.mxu0 %v808
        %824 = vmatprep.subr.bf16.mxu0 0
        %825 = vmatpush1.bf16.xpose.msra.mxu0 %v805
        %826 = vmatprep.subr.bf16.mxu0 0
        %827 = vmatpush2.bf16.xpose.msra.mxu0 0
        %828 = vmatprep.subr.bf16.mxu0 0
        %829 = vmatpush2.bf16.xpose.msra.mxu0 0
        %830 = vmatprep.subr.bf16.mxu0 0
        %831 = vmatpush2.bf16.xpose.msra.mxu0 0
        %832 = vmatprep.subr.bf16.mxu0 0
        %833 = vmatpush2.bf16.xpose.msra.mxu0 0
        %834 = vmatprep.subr.bf16.mxu0 0
        %835 = vmatpush2.bf16.xpose.msra.mxu0 0
        %836 = vmatprep.subr.bf16.mxu0 0
        %837 = vmatpush2.bf16.xpose.msra.mxu0 0
        %838 = vmatprep.subr.bf16.mxu0 0
        %839 = vmatpush2.bf16.xpose.msra.mxu0 0
        %840 = vmatprep.subr.bf16.mxu0 0
        %841 = vmatpush2.bf16.xpose.msra.mxu0 0
        %842 = vmatprep.mubr.bf16.mxu0 0
        %843 = vmatmul.mubr.bf16.gmra.mxu0 %v802
        %v844 = vpop.f32.mrf.mxu0
        %v845 = vadd.f32 %v799, %v844
        %v846 = vpop.f32.mrf.mxu0
        %v847 = vpop.f32.mrf.mxu0
        %v848 = vpop.f32.mrf.mxu0
        %849 = vdwg.mxu0
        %vm850 = vcmask 253952
        %851 = vst.msk [vmem:[%s327] sm:$0x1] %vm850, %v845
        %s852 = sand.u32 %s227, 1
        %s853 = scalar_lea.sflag [#allocation4], %s852
        %s854 = sand.u32 %s227, 1
        %s855 = scalar_lea.vmem [#allocation3], %s854
        // Predicated region
        $region57: #{tpu_custom_call.1} parent=55 // pred_check
          %p856 = pneg %p237
        $region58: #{tpu_custom_call.1} parent=55 // pred_check_branch
          %858 = sbr.rel (%p856) target = $region60
        $region59: #{tpu_custom_call.1} parent=55 // pred_region
          %s860 = ssub.s32 16, 16
          %861 = vsyncadd %s853, %s860
          %s862 = smul.addr %s25, 16
          %s863 = scalar_lea.hbm %s9, %s862
          %s865 = sshll.u32 %s855, 4
          %s866 = int_to_ptr.vmem [resolvable:$true] %s865
          %868 = dma.vmem_to_hbm [thread:$0]  %s866, 16, %s863, %s853
        $region60: #{tpu_custom_call.1} parent=55 // pred_fallthru
          _
      $region56: #{tpu_custom_call.1} parent=5 // pred_fallthru
        _
      %p869 = scmp.le.s32.totalorder 2, %s20
      // Predicated region
      $region61: #{tpu_custom_call.1} parent=5 // pred_check
        %p870 = pneg %p869
      $region62: #{tpu_custom_call.1} parent=5 // pred_check_branch
        %872 = sbr.rel (%p870) target = $region64
      $region63: #{tpu_custom_call.1} parent=5 // pred_region
        %s873 = ssub.s32 %s20, 2
        // Predicated region
        $region65: #{tpu_custom_call.1} parent=63 // pred_check
          %p874 = pneg %p243
        $region66: #{tpu_custom_call.1} parent=63 // pred_check_branch
          %876 = sbr.rel (%p874) target = $region68
        $region67: #{tpu_custom_call.1} parent=63 // pred_region
          %s877 = sand.u32 %s228, 1
          %s878 = scalar_lea.sflag [#allocation4], %s877
          %s879 = sand.u32 %s228, 1
          %s880 = scalar_lea.vmem [#allocation3], %s879
          %881 = dma.done %s878, 16
        $region68: #{tpu_custom_call.1} parent=63 // pred_fallthru
          _
      $region64: #{tpu_custom_call.1} parent=5 // pred_fallthru
        _
    $region6: #{tpu_custom_call.1} parent=1 // loop_footer
      %s24 = sadd.s32 1, %s20
    $region7: #{tpu_custom_call.1} parent=1 // loop_footer_branch
      %19 = sbr.rel target = $region3
    $region8: #{tpu_custom_call.1} parent=1 // loop_exit
      _
    %882 = vsyncpa [#allocation4], 1
    %s883 = scalar_lea.sflag [#allocation4], 1
    %884 = vsyncpa %s883, 1

</llo_original>
